<compile_context>
chip_gen: v7x
topology: tpu7x:2x2x1
jax: 0.10.0
libtpu: 0.0.40
codegen_flags: <defaults>
</compile_context>

<pallas_src>
import functools
import math

import jax
import jax.numpy as jnp
from jax.experimental import pallas as pl
from jax.experimental.pallas import tpu as pltpu

LANE = 128           # classifier output padded to the TPU lane width (lane-dense stores)
NEG_MASK = -1e30     # finite "-inf" (avoids 0 * -inf = NaN in the masked logsumexp)
IGNORE_INDEX = -100  # nn.CrossEntropyLoss default ignore_index


def _round_up(x, m):
    return ((x + m - 1) // m) * m


def _bf16_tanh_default():
    """bf16 tanh uses the bf16 EUP on v6e/v7x; v5e has no bf16 EUP -> keep f32 there."""
    try:
        kind = jax.devices()[0].device_kind.lower()
    except Exception:
        return True
    return not ("v5 lite" in kind or "v5e" in kind or "v5litepod" in kind)


# ---------------------------------------------------------------------------
# Fused kernel: pooler matmul -> tanh -> (dropout=identity) -> classifier
# matmul + bias -> lane-dense logits store + per-tile cross-entropy partials.
# ---------------------------------------------------------------------------
def _fused_head_kernel(mean_ref, pw_ref, pb_ref, cw_ref, cb_ref, labels_ref,
                       *out_refs, num_class, batch, tile_m, tanh_bf16, with_logits):
    if with_logits:
        logits_ref, stats_ref = out_refs
    else:
        (stats_ref,) = out_refs

    # pooler: pooled = tanh(mean @ pooler_w + pooler_b)  (bf16 MXU operands, f32 acc).
    # The f32->bf16 cast of the activation happens HERE (VPU, hidden under the MXU)
    # instead of a wrapper-side XLA pass over [B, D].
    mean_bf = mean_ref[...].astype(jnp.bfloat16)
    h = jnp.dot(mean_bf, pw_ref[...], preferred_element_type=jnp.float32)
    z = h + pb_ref[...]
    if tanh_bf16:
        pooled = jnp.tanh(z.astype(jnp.bfloat16))      # bf16 EUP (v6e/v7x); result feeds bf16 matmul
    else:
        pooled = jnp.tanh(z).astype(jnp.bfloat16)      # f32 EUP path (v5e)

    # nn.Dropout is identity at inference.
    # TODO(synk): a training path would mask with pltpu.prng_seed/prng_random_bits.

    # classifier: logits = pooled @ W^T + b  (lane-dense [tile_m, 128] f32)
    logits = jnp.dot(pooled, cw_ref[...], preferred_element_type=jnp.float32) + cb_ref[...]
    if with_logits:
        logits_ref[...] = logits

    # TODO(synk): if the bundle dump shows the tanh/CE work as a serial tail after the
    # pooler matmul, chunk tile_m into 2-4 row sub-blocks with an unrolled lax.fori_loop
    # so matmul(chunk k+1) issues while tanh/classifier/CE of chunk k drain on EUP/VPU/XLU.

    # CrossEntropyLoss per-row terms: logsumexp(logits) - logits[label]  (all f32)
    tm, c_pad = logits.shape
    lane = jax.lax.broadcasted_iota(jnp.int32, (tm, c_pad), 1)
    class_ok = lane < num_class
    masked = jnp.where(class_ok, logits, NEG_MASK)            # padded classes excluded
    m = jnp.max(masked, axis=-1, keepdims=True)
    lse = jnp.log(jnp.sum(jnp.exp(masked - m), axis=-1, keepdims=True)) + m
    lbl = labels_ref[...]                                     # int32 [tm, 1]
    picked = jnp.sum(jnp.where(lane == lbl, logits, 0.0), axis=-1, keepdims=True)

    # Row validity: ragged edge rows (row >= batch, possibly garbage data) and
    # ignore_index labels contribute nothing -- jnp.where so NaN can't leak through.
    row = jax.lax.broadcasted_iota(jnp.int32, (tm, 1), 0) + pl.program_id(0) * tile_m
    valid = (row < batch) & (lbl != IGNORE_INDEX)
    term = jnp.where(valid, lse - picked, 0.0)                # f32 [tm, 1]
    valid_f = valid.astype(jnp.float32)

    # Per-tile partial reduction -> ONE unmasked lane-dense (8, 128) store per tile
    # (no [tile_m, 1] lane-1 masked stores): loss sum at (0, 0), valid count at (0, 1).
    loss_sum = jnp.sum(term, axis=0, keepdims=True)           # (1, 1)
    cnt = jnp.sum(valid_f, axis=0, keepdims=True)             # (1, 1)
    sub = jax.lax.broadcasted_iota(jnp.int32, (8, LANE), 0)
    ln = jax.lax.broadcasted_iota(jnp.int32, (8, LANE), 1)
    stats_ref[...] = jnp.where((sub == 0) & (ln == 0), loss_sum,
                               jnp.where((sub == 0) & (ln == 1), cnt, 0.0))


# ---------------------------------------------------------------------------
# One-time weight preparation (outside the per-forward path): transpose the
# PyTorch-layout classifier weight [C, D] -> [D, C], zero-pad the class axis to
# 128 lanes, and cast matmul operands to bf16 (halves weight DMA bytes).
# ---------------------------------------------------------------------------
def prepare_head_params(params):
    d = params["pooler_w"].shape[0]
    c = params["classifier_w"].shape[0]
    c_pad = _round_up(max(c, LANE), LANE)
    cls_w_t = jnp.transpose(params["classifier_w"])                       # [D, C], once
    cls_w_pad = jnp.zeros((d, c_pad), jnp.float32).at[:, :c].set(cls_w_t)
    cls_b_pad = jnp.zeros((1, c_pad), jnp.float32).at[0, :c].set(params["classifier_b"])
    return {
        "pooler_w_bf": params["pooler_w"].astype(jnp.bfloat16),           # [D, D]
        "pooler_b": params["pooler_b"].reshape(1, d).astype(jnp.float32), # [1, D]
        "cls_w_bf": cls_w_pad.astype(jnp.bfloat16),                       # [D, Cpad]
        "cls_b": cls_b_pad,                                               # [1, Cpad]
        "num_class": int(c),
    }


def role_classification_head(head, mean_emb, labels=None, *, tile_m=None,
                             return_logits=True, tanh_in_bf16=None):
    """Fused pooler + dropout(identity) + classifier + CrossEntropy.

    mean_emb: [B, D] f32 (encoder pooled/mean vector), labels: [B] int or None.
    Returns (loss scalar f32 or None, logits [B, C] f32 or None)."""
    b, d = mean_emb.shape
    num_class = head["num_class"]
    c_pad = head["cls_b"].shape[1]

    if tanh_in_bf16 is None:
        tanh_in_bf16 = _bf16_tanh_default()

    # Batch-tiled grid.  tile_m=512 fits well inside the 32 MiB scoped-VMEM budget
    # (set below) at D<=1024 on v5e/v6e/v7x, including double-buffered inputs and
    # the f32 intermediates; keep it on v7x too (fewer ~0.35us grid steps wins).
    if tile_m is None:
        tile_m = 512
    if tile_m >= b:
        tile_m = b                                        # single full block
    else:
        tile_m = min(b, max(16, _round_up(tile_m, 16)))   # 16-row multiples: bf16 packing
    n_tiles = pl.cdiv(b, tile_m)                          # ragged edge handled in-kernel

    have_labels = labels is not None
    if have_labels:
        labels2 = labels.astype(jnp.int32).reshape(b, 1)
    else:
        labels2 = jnp.full((b, 1), IGNORE_INDEX, jnp.int32)

    kernel = functools.partial(
        _fused_head_kernel, num_class=num_class, batch=b, tile_m=tile_m,
        tanh_bf16=bool(tanh_in_bf16), with_logits=bool(return_logits))

    # NOTE: the four weight/bias specs are grid-invariant (constant index_map) so
    # they are not re-DMA'd across tiles; single-buffering them (pipeline_mode=
    # pl.Buffered(1)) would halve their VMEM footprint but is left at the default
    # for portability -- the explicit vmem_limit_bytes below covers the headroom.
    in_specs = [
        pl.BlockSpec((tile_m, d), lambda i: (i, 0)),      # mean tile (f32; cast in kernel)
        pl.BlockSpec((d, d), lambda i: (0, 0)),           # pooler W (resident)
        pl.BlockSpec((1, d), lambda i: (0, 0)),           # pooler b
        pl.BlockSpec((d, c_pad), lambda i: (0, 0)),       # classifier W^T (resident)
        pl.BlockSpec((1, c_pad), lambda i: (0, 0)),       # classifier b
        pl.BlockSpec((tile_m, 1), lambda i: (i, 0)),      # labels tile
    ]
    stats_spec = pl.BlockSpec((8, LANE), lambda i: (i, 0))
    stats_shape = jax.ShapeDtypeStruct((8 * n_tiles, LANE), jnp.float32)
    if return_logits:
        out_specs = (pl.BlockSpec((tile_m, c_pad), lambda i: (i, 0)), stats_spec)
        out_shape = (jax.ShapeDtypeStruct((b, c_pad), jnp.float32), stats_shape)
    else:
        out_specs = (stats_spec,)
        out_shape = (stats_shape,)

    outs = pl.pallas_call(
        kernel,
        grid=(n_tiles,),
        in_specs=in_specs,
        out_specs=out_specs,
        out_shape=out_shape,
        compiler_params=pltpu.CompilerParams(
            dimension_semantics=("parallel",),            # batch tiles split across TCs (v7x)
            vmem_limit_bytes=32 * 1024 * 1024,            # lifts v5e's 16 MiB default limit
        ),
    )(mean_emb, head["pooler_w_bf"], head["pooler_b"],
      head["cls_w_bf"], head["cls_b"], labels2)

    if return_logits:
        logits_pad, stats = outs
        logits = logits_pad[:, :num_class]                # tiny [B, C] slice of the padded slab
    else:
        stats = outs[0]
        logits = None

    loss = None
    if have_labels:
        # rows 1..7 of every per-tile stats block are zero, so plain column sums suffice
        loss_sum = jnp.sum(stats[:, 0])
        cnt = jnp.sum(stats[:, 1])
        loss = loss_sum / jnp.maximum(cnt, 1.0)           # mean over non-ignored targets
    return loss, logits


# ---------------------------------------------------------------------------
# Minimal deterministic "encoder" stub (plain-JAX glue): embedding lookup +
# attention-masked mean.  The dense+tanh pooler is fused into the kernel above.
# TODO(synk): the real encoder is an externally injected transformer; feed its
# pooled ([CLS]) hidden state into role_classification_head instead.
# ---------------------------------------------------------------------------
def encoder_masked_mean(params, input_ids, attention_mask):
    emb = params["embedding"][input_ids]                            # [B, S, D]
    mask = attention_mask[..., None].astype(jnp.float32)            # [B, S, 1]
    summed = jnp.sum(emb * mask, axis=1)                            # [B, D]
    denom = jnp.maximum(jnp.sum(mask, axis=1), 1.0)                 # [B, 1]
    return summed / denom


def init_params(key, vocab_size, sent_emb_dim, num_class):
    k_emb, k_pool, k_cls = jax.random.split(key, 3)
    embedding = jax.random.normal(k_emb, (vocab_size, sent_emb_dim), jnp.float32) * 0.02
    pooler_w = jax.random.normal(k_pool, (sent_emb_dim, sent_emb_dim), jnp.float32) * 0.02
    pooler_b = jnp.zeros((sent_emb_dim,), jnp.float32)
    # nn.init.xavier_uniform_ on classifier weight [num_class, sent_emb_dim]
    bound = math.sqrt(6.0 / (sent_emb_dim + num_class))
    cls_w = jax.random.uniform(
        k_cls, (num_class, sent_emb_dim), jnp.float32, minval=-bound, maxval=bound
    )
    cls_b = jnp.zeros((num_class,), jnp.float32)
    return {
        "embedding": embedding,
        "pooler_w": pooler_w,
        "pooler_b": pooler_b,
        "classifier_w": cls_w,   # PyTorch layout [C, D]
        "classifier_b": cls_b,
    }


def model_forward(params, head, input_ids, attention_mask, labels):
    mean_emb = encoder_masked_mean(params, input_ids, attention_mask)   # [B, D] f32
    loss, logits = role_classification_head(head, mean_emb, labels)
    return loss, logits


if __name__ == "__main__":
    B, S, V, D, C = 8, 8, 32, 32, 8   # batch, seq, vocab, sent_emb_dim, num_class

    key = jax.random.PRNGKey(0)
    k_params, k_ids, k_labels, k_mean2, k_lab2 = jax.random.split(key, 5)

    params = init_params(k_params, V, D, C)
    head = prepare_head_params(params)   # one-time: transpose + pad + bf16 cast
    input_ids = jax.random.randint(k_ids, (B, S), 0, V, dtype=jnp.int32)
    attention_mask = jnp.ones((B, S), jnp.int32)
    labels = jax.random.randint(k_labels, (B,), 0, C, dtype=jnp.int32)

    loss, logits = model_forward(params, head, input_ids, attention_mask, labels)
    jax.block_until_ready((loss, logits))

    # pure-JAX f32 reference (bf16 matmul operands in the kernel -> loose tolerance)
    def ref_head(mean, lab):
        pooled = jnp.tanh(mean @ params["pooler_w"] + params["pooler_b"])
        lg = pooled @ params["classifier_w"].T + params["classifier_b"]
        logp = jax.nn.log_softmax(lg, axis=-1)
        ls = -jnp.mean(logp[jnp.arange(mean.shape[0]), lab])
        return ls, lg

    mean_ref = encoder_masked_mean(params, input_ids, attention_mask)
    loss_ref, logits_ref = ref_head(mean_ref, labels)
    assert logits.shape == (B, C), "bad logits shape"
    assert jnp.allclose(logits, logits_ref, atol=2e-2), "logits mismatch"
    assert jnp.allclose(loss, loss_ref, atol=2e-2), "loss mismatch"

    # loss-only path: skips the 128-lane-padded f32 logits writeback entirely
    loss_only, no_logits = role_classification_head(head, mean_ref, labels,
                                                    return_logits=False)
    jax.block_until_ready(loss_only)
    assert no_logits is None
    assert jnp.allclose(loss_only, loss_ref, atol=2e-2), "loss-only mismatch"

    # ragged batch (B not a multiple of tile_m): exercises the un-padded edge tile
    B2 = 24
    mean2 = jax.random.normal(k_mean2, (B2, D), jnp.float32) * 0.1
    labels2 = jax.random.randint(k_lab2, (B2,), 0, C, dtype=jnp.int32)
    loss2, logits2 = role_classification_head(head, mean2, labels2, tile_m=16)
    jax.block_until_ready((loss2, logits2))
    loss2_ref, logits2_ref = ref_head(mean2, labels2)
    assert logits2.shape == (B2, C), "bad ragged logits shape"
    assert jnp.allclose(logits2, logits2_ref, atol=2e-2), "ragged logits mismatch"
    assert jnp.allclose(loss2, loss2_ref, atol=2e-2), "ragged loss mismatch"

    print("KERNEL_OK")
</pallas_src>

<mosaic_0001>
module attributes {stable_mosaic.version = 11 : i64} {
  func.func @_fused_head_kernel(%arg0: i32, %arg1: memref<8x32xf32, #tpu.memory_space<vmem>>, %arg2: memref<32x32xbf16, #tpu.memory_space<vmem>>, %arg3: memref<1x32xf32, #tpu.memory_space<vmem>>, %arg4: memref<32x128xbf16, #tpu.memory_space<vmem>>, %arg5: memref<1x128xf32, #tpu.memory_space<vmem>>, %arg6: memref<8x1xi32, #tpu.memory_space<vmem>>, %arg7: memref<8x128xf32, #tpu.memory_space<vmem>>, %arg8: memref<8x128xf32, #tpu.memory_space<vmem>>) attributes {dimension_semantics = [#tpu.dimension_semantics<parallel>], iteration_bounds = array<i64: 1>, scalar_prefetch = 0 : i64, scratch_operands = 0 : i64, tpu.core_type = #tpu.core_type<tc>, window_params = [{transform_indices = @transform_0, window_bounds = array<i64: 8, 32>}, {pipeline_mode = #tpu.pipeline_mode<synchronous>, transform_indices = @transform_1, window_bounds = array<i64: 32, 32>}, {pipeline_mode = #tpu.pipeline_mode<synchronous>, transform_indices = @transform_2, window_bounds = array<i64: 1, 32>}, {pipeline_mode = #tpu.pipeline_mode<synchronous>, transform_indices = @transform_3, window_bounds = array<i64: 32, 128>}, {pipeline_mode = #tpu.pipeline_mode<synchronous>, transform_indices = @transform_4, window_bounds = array<i64: 1, 128>}, {transform_indices = @transform_5, window_bounds = array<i64: 8, 1>}, {transform_indices = @transform_6, window_bounds = array<i64: 8, 128>}, {transform_indices = @transform_7, window_bounds = array<i64: 8, 128>}]} {
    %c0 = arith.constant 0 : index
    %c0_0 = arith.constant 0 : index
    %0 = vector.load %arg1[%c0, %c0_0] : memref<8x32xf32, #tpu.memory_space<vmem>>, vector<8x32xf32>
    %1 = arith.truncf %0 : vector<8x32xf32> to vector<8x32xbf16>
    %c0_1 = arith.constant 0 : index
    %c0_2 = arith.constant 0 : index
    %2 = vector.load %arg2[%c0_1, %c0_2] : memref<32x32xbf16, #tpu.memory_space<vmem>>, vector<32x32xbf16>
    %cst = arith.constant dense<0.000000e+00> : vector<8x32xf32>
    %3 = tpu.matmul %1, %2, %cst {dimension_numbers = #tpu.dot_dimension_numbers<[1], [0], [0], [1], [0, 0, 1, 1], [], []>} : vector<8x32xbf16>, vector<32x32xbf16>, vector<8x32xf32> -> vector<8x32xf32>
    %c0_3 = arith.constant 0 : index
    %c0_4 = arith.constant 0 : index
    %4 = vector.load %arg3[%c0_3, %c0_4] : memref<1x32xf32, #tpu.memory_space<vmem>>, vector<1x32xf32>
    %5 = vector.broadcast %4 : vector<1x32xf32> to vector<8x32xf32>
    %6 = arith.addf %3, %5 : vector<8x32xf32>
    %7 = arith.truncf %6 : vector<8x32xf32> to vector<8x32xbf16>
    %8 = math.tanh %7 : vector<8x32xbf16>
    %c0_5 = arith.constant 0 : index
    %c0_6 = arith.constant 0 : index
    %9 = vector.load %arg4[%c0_5, %c0_6] : memref<32x128xbf16, #tpu.memory_space<vmem>>, vector<32x128xbf16>
    %cst_7 = arith.constant dense<0.000000e+00> : vector<8x128xf32>
    %10 = tpu.matmul %8, %9, %cst_7 {dimension_numbers = #tpu.dot_dimension_numbers<[1], [0], [0], [1], [0, 0, 1, 1], [], []>} : vector<8x32xbf16>, vector<32x128xbf16>, vector<8x128xf32> -> vector<8x128xf32>
    %c0_8 = arith.constant 0 : index
    %c0_9 = arith.constant 0 : index
    %11 = vector.load %arg5[%c0_8, %c0_9] : memref<1x128xf32, #tpu.memory_space<vmem>>, vector<1x128xf32>
    %12 = vector.broadcast %11 : vector<1x128xf32> to vector<8x128xf32>
    %13 = arith.addf %10, %12 : vector<8x128xf32>
    %c0_10 = arith.constant 0 : index
    %c0_11 = arith.constant 0 : index
    %14 = vector.load %arg7[%c0_10, %c0_11] : memref<8x128xf32, #tpu.memory_space<vmem>>, vector<8x128xf32>
    tpu.vector_store %arg7[%c0_10, %c0_11], %13 {strides = array<i32>} : memref<8x128xf32, #tpu.memory_space<vmem>>, vector<8x128xf32>,
    %15 = tpu.iota {dimensions = array<i32: 1>} : vector<8x128xi32>
    %c8_i32 = arith.constant 8 : i32
    %16 = vector.broadcast %c8_i32 : i32 to vector<8x128xi32>
    %17 = arith.cmpi slt, %15, %16 : vector<8x128xi32>
    %cst_12 = arith.constant -1.000000e+30 : f32
    %18 = vector.broadcast %cst_12 : f32 to vector<8x128xf32>
    %19 = arith.select %17, %13, %18 : vector<8x128xi1>, vector<8x128xf32>
    %cst_13 = arith.constant dense<0xFF800000> : vector<8xf32>
    %20 = vector.multi_reduction <maximumf>, %19, %cst_13 [1] : vector<8x128xf32> to vector<8xf32>
    %21 = vector.shape_cast %20 : vector<8xf32> to vector<8x1xf32>
    %22 = vector.broadcast %21 : vector<8x1xf32> to vector<8x128xf32>
    %23 = arith.subf %19, %22 : vector<8x128xf32>
    %24 = math.exp %23 : vector<8x128xf32>
    %cst_14 = arith.constant dense<0.000000e+00> : vector<8xf32>
    %25 = vector.multi_reduction <add>, %24, %cst_14 [1] : vector<8x128xf32> to vector<8xf32>
    %26 = vector.shape_cast %25 : vector<8xf32> to vector<8x1xf32>
    %27 = math.log %26 : vector<8x1xf32>
    %28 = arith.addf %27, %21 : vector<8x1xf32>
    %c0_15 = arith.constant 0 : index
    %c0_16 = arith.constant 0 : index
    %29 = vector.load %arg6[%c0_15, %c0_16] : memref<8x1xi32, #tpu.memory_space<vmem>>, vector<8x1xi32>
    %30 = vector.broadcast %29 : vector<8x1xi32> to vector<8x128xi32>
    %31 = arith.cmpi eq, %15, %30 : vector<8x128xi32>
    %cst_17 = arith.constant 0.000000e+00 : f32
    %32 = vector.broadcast %cst_17 : f32 to vector<8x128xf32>
    %33 = arith.select %31, %13, %32 : vector<8x128xi1>, vector<8x128xf32>
    %cst_18 = arith.constant dense<0.000000e+00> : vector<8xf32>
    %34 = vector.multi_reduction <add>, %33, %cst_18 [1] : vector<8x128xf32> to vector<8xf32>
    %35 = vector.shape_cast %34 : vector<8xf32> to vector<8x1xf32>
    %36 = tpu.iota {dimensions = array<i32: 0>} : vector<8x1xi32>
    %c8_i32_19 = arith.constant 8 : i32
    %37 = arith.muli %arg0, %c8_i32_19 : i32
    %38 = vector.broadcast %37 : i32 to vector<8x1xi32>
    %39 = arith.addi %36, %38 : vector<8x1xi32>
    %c8_i32_20 = arith.constant 8 : i32
    %40 = vector.broadcast %c8_i32_20 : i32 to vector<8x1xi32>
    %41 = arith.cmpi slt, %39, %40 : vector<8x1xi32>
    %c-100_i32 = arith.constant -100 : i32
    %42 = vector.broadcast %c-100_i32 : i32 to vector<8x1xi32>
    %43 = arith.cmpi ne, %29, %42 : vector<8x1xi32>
    %44 = arith.andi %41, %43 : vector<8x1xi1>
    %45 = arith.subf %28, %35 : vector<8x1xf32>
    %cst_21 = arith.constant 0.000000e+00 : f32
    %46 = vector.broadcast %cst_21 : f32 to vector<8x1xf32>
    %47 = arith.select %44, %45, %46 : vector<8x1xi1>, vector<8x1xf32>
    %48 = arith.extui %44 : vector<8x1xi1> to vector<8x1xi32>
    %49 = arith.sitofp %48 : vector<8x1xi32> to vector<8x1xf32>
    %cst_22 = arith.constant dense<0.000000e+00> : vector<1xf32>
    %50 = vector.multi_reduction <add>, %47, %cst_22 [0] : vector<8x1xf32> to vector<1xf32>
    %51 = vector.shape_cast %50 : vector<1xf32> to vector<1x1xf32>
    %cst_23 = arith.constant dense<0.000000e+00> : vector<1xf32>
    %52 = vector.multi_reduction <add>, %49, %cst_23 [0] : vector<8x1xf32> to vector<1xf32>
    %53 = vector.shape_cast %52 : vector<1xf32> to vector<1x1xf32>
    %54 = tpu.iota {dimensions = array<i32: 0>} : vector<8x128xi32>
    %55 = tpu.iota {dimensions = array<i32: 1>} : vector<8x128xi32>
    %c0_i32 = arith.constant 0 : i32
    %56 = vector.broadcast %c0_i32 : i32 to vector<8x128xi32>
    %57 = arith.cmpi eq, %54, %56 : vector<8x128xi32>
    %c0_i32_24 = arith.constant 0 : i32
    %58 = vector.broadcast %c0_i32_24 : i32 to vector<8x128xi32>
    %59 = arith.cmpi eq, %55, %58 : vector<8x128xi32>
    %60 = arith.andi %57, %59 : vector<8x128xi1>
    %c0_i32_25 = arith.constant 0 : i32
    %61 = vector.broadcast %c0_i32_25 : i32 to vector<8x128xi32>
    %62 = arith.cmpi eq, %54, %61 : vector<8x128xi32>
    %c1_i32 = arith.constant 1 : i32
    %63 = vector.broadcast %c1_i32 : i32 to vector<8x128xi32>
    %64 = arith.cmpi eq, %55, %63 : vector<8x128xi32>
    %65 = arith.andi %62, %64 : vector<8x128xi1>
    %cst_26 = arith.constant 0.000000e+00 : f32
    %66 = vector.shape_cast %53 : vector<1x1xf32> to vector<1x1xf32>
    %67 = vector.broadcast %66 : vector<1x1xf32> to vector<8x128xf32>
    %68 = vector.broadcast %cst_26 : f32 to vector<8x128xf32>
    %69 = arith.select %65, %67, %68 : vector<8x128xi1>, vector<8x128xf32>
    %70 = vector.shape_cast %51 : vector<1x1xf32> to vector<1x1xf32>
    %71 = vector.broadcast %70 : vector<1x1xf32> to vector<8x128xf32>
    %72 = arith.select %60, %71, %69 : vector<8x128xi1>, vector<8x128xf32>
    %c0_27 = arith.constant 0 : index
    %c0_28 = arith.constant 0 : index
    %73 = vector.load %arg8[%c0_27, %c0_28] : memref<8x128xf32, #tpu.memory_space<vmem>>, vector<8x128xf32>
    tpu.vector_store %arg8[%c0_27, %c0_28], %72 {strides = array<i32>} : memref<8x128xf32, #tpu.memory_space<vmem>>, vector<8x128xf32>,
    return
  }
  func.func @transform_0(%arg0: i32) -> (i32, i32) {
    %c0_i32 = arith.constant 0 : i32
    %c0_i32_0 = arith.constant 0 : i32
    return %arg0, %c0_i32 : i32, i32
  }
  func.func @transform_1(%arg0: i32) -> (i32, i32) {
    %c0_i32 = arith.constant 0 : i32
    %c0_i32_0 = arith.constant 0 : i32
    %c0_i32_1 = arith.constant 0 : i32
    return %c0_i32, %c0_i32_0 : i32, i32
  }
  func.func @transform_2(%arg0: i32) -> (i32, i32) {
    %c0_i32 = arith.constant 0 : i32
    %c0_i32_0 = arith.constant 0 : i32
    %c0_i32_1 = arith.constant 0 : i32
    return %c0_i32, %c0_i32_0 : i32, i32
  }
  func.func @transform_3(%arg0: i32) -> (i32, i32) {
    %c0_i32 = arith.constant 0 : i32
    %c0_i32_0 = arith.constant 0 : i32
    %c0_i32_1 = arith.constant 0 : i32
    return %c0_i32, %c0_i32_0 : i32, i32
  }
  func.func @transform_4(%arg0: i32) -> (i32, i32) {
    %c0_i32 = arith.constant 0 : i32
    %c0_i32_0 = arith.constant 0 : i32
    %c0_i32_1 = arith.constant 0 : i32
    return %c0_i32, %c0_i32_0 : i32, i32
  }
  func.func @transform_5(%arg0: i32) -> (i32, i32) {
    %c0_i32 = arith.constant 0 : i32
    %c0_i32_0 = arith.constant 0 : i32
    return %arg0, %c0_i32 : i32, i32
  }
  func.func @transform_6(%arg0: i32) -> (i32, i32) {
    %c0_i32 = arith.constant 0 : i32
    %c0_i32_0 = arith.constant 0 : i32
    return %arg0, %c0_i32 : i32, i32
  }
  func.func @transform_7(%arg0: i32) -> (i32, i32) {
    %c0_i32 = arith.constant 0 : i32
    %c0_i32_0 = arith.constant 0 : i32
    return %arg0, %c0_i32 : i32, i32
  }
}

</mosaic_0001>

<llo_original>
// kernel: tpu_custom_call.1
$region0: #{tpu_custom_call.1}
  #allocation0 [shape = 'u32[]', space=smem, size = 0x4, offset = 0x4, fixed_abs, tag = 'smem constant byte address 0x4 - core index']
  #allocation1 [shape = 'u32[144,128]{1,0:T(1,128)}', space=vmem, size = 0x12000, scoped, tag = 'internal scratch']
  %s0 = inlined_call_operand.hbm [shape: f32[8,32], index: 0, kind: input, shape index: {}]
  %s1 = inlined_call_operand.hbm [shape: bf16[32,32], index: 1, kind: input, shape index: {}]
  %s2 = inlined_call_operand.vmem [shape: f32[1,32], index: 2, kind: input, shape index: {}]
  %s3 = inlined_call_operand.vmem [shape: bf16[32,128], index: 3, kind: input, shape index: {}]
  %s4 = inlined_call_operand.vmem [shape: f32[1,128], index: 4, kind: input, shape index: {}]
  %s5 = inlined_call_operand.vmem [shape: s32[8,1], index: 5, kind: input, shape index: {}]
  %s6 = inlined_call_operand.hbm [shape: f32[8,128], index: 6, kind: output, shape index: {0}]
  %s7 = inlined_call_operand.hbm [shape: f32[8,128], index: 7, kind: output, shape index: {1}]
  %8 = xla_tuple %s6, %s7
  %s9 = sld [smem:[#allocation0]]
  $region50: #{tpu_custom_call.1} parent=0
    _
  %s11 = ssub.s32 1, %s9
  %s12 = scalar_select 0, %s11, %s9
  $region1: #{tpu_custom_call.1} parent=0
    #allocation2 [shape = 'u8[4096]{0}', space=vmem, size = 0x1000, scoped, tag = 'input window, operand 0, single buffered']
    #allocation3 [shape = 's32[1]{0}', space=sflag, size = 0x4, scoped, tag = 'scoped memory for tpu_custom_call.1']
    #allocation4 [shape = 's32[1]{0}', space=sflag, size = 0x4, scoped, tag = 'scoped memory for tpu_custom_call.1']
    #allocation5 [shape = 'u8[8192]{0}', space=vmem, size = 0x2000, scoped, tag = 'input window, operand 1, single buffered']
    #allocation6 [shape = 's32[1]{0}', space=sflag, size = 0x4, scoped, tag = 'scoped memory for tpu_custom_call.1']
    #allocation7 [shape = 'u8[4096]{0}', space=vmem, size = 0x1000, scoped, tag = 'output window, operand 0, single buffered']
    #allocation8 [shape = 'u8[4096]{0}', space=vmem, size = 0x1000, scoped, tag = 'output window, operand 1, single buffered']
    #allocation9 [shape = 's32[1]{0}', space=sflag, size = 0x4, scoped, tag = 'scoped memory for tpu_custom_call.1']
    %13 = vsyncpa [#allocation3], 0
    %14 = vsyncpa [#allocation6], 0
    %15 = vsyncpa [#allocation4], 0
    %16 = vsyncpa [#allocation9], 0
    // Predicated region
    $region2: #{tpu_custom_call.1} parent=1 // pred_check
      _
    $region3: #{tpu_custom_call.1} parent=1 // pred_check_branch
      %18 = sbr.rel (0) target = $region5
    $region4: #{tpu_custom_call.1} parent=1 // pred_region
      %s20 = ssub.s32 128, 128
      %21 = vsyncadd [#allocation3], %s20
      %s23 = sshll.u32 [#allocation2], 4
      %s24 = int_to_ptr.vmem [resolvable:$true] %s23
      %26 = dma.hbm_to_vmem [thread:$0]  %s0, 128, %s24, [#allocation3]
    $region5: #{tpu_custom_call.1} parent=1 // pred_fallthru
      _
    // Predicated region
    $region6: #{tpu_custom_call.1} parent=1 // pred_check
      _
    $region7: #{tpu_custom_call.1} parent=1 // pred_check_branch
      %28 = sbr.rel (0) target = $region9
    $region8: #{tpu_custom_call.1} parent=1 // pred_region
      %s30 = ssub.s32 256, 256
      %31 = vsyncadd [#allocation6], %s30
      %s32 = sshll.u32 [#allocation5], 4
      %s33 = int_to_ptr.vmem [resolvable:$true] %s32
      %38 = dma.hbm_to_vmem [thread:$0]  %s1, 256, %s33, [#allocation6], 64, 64, 4
    $region9: #{tpu_custom_call.1} parent=1 // pred_fallthru
      _
    // Predicated region
    $region10: #{tpu_custom_call.1} parent=1 // pred_check
      _
    $region11: #{tpu_custom_call.1} parent=1 // pred_check_branch
      %40 = sbr.rel (0) target = $region13
    $region12: #{tpu_custom_call.1} parent=1 // pred_region
      _
    $region13: #{tpu_custom_call.1} parent=1 // pred_fallthru
      _
    // Predicated region
    $region14: #{tpu_custom_call.1} parent=1 // pred_check
      _
    $region15: #{tpu_custom_call.1} parent=1 // pred_check_branch
      %42 = sbr.rel (0) target = $region17
    $region16: #{tpu_custom_call.1} parent=1 // pred_region
      _
    $region17: #{tpu_custom_call.1} parent=1 // pred_fallthru
      _
    // Predicated region
    $region18: #{tpu_custom_call.1} parent=1 // pred_check
      _
    $region19: #{tpu_custom_call.1} parent=1 // pred_check_branch
      %44 = sbr.rel (0) target = $region21
    $region20: #{tpu_custom_call.1} parent=1 // pred_region
      _
    $region21: #{tpu_custom_call.1} parent=1 // pred_fallthru
      _
    // Predicated region
    $region22: #{tpu_custom_call.1} parent=1 // pred_check
      _
    $region23: #{tpu_custom_call.1} parent=1 // pred_check_branch
      %46 = sbr.rel (0) target = $region25
    $region24: #{tpu_custom_call.1} parent=1 // pred_region
      _
    $region25: #{tpu_custom_call.1} parent=1 // pred_fallthru
      _
    // Predicated region
    $region26: #{tpu_custom_call.1} parent=1 // pred_check
      _
    $region27: #{tpu_custom_call.1} parent=1 // pred_check_branch
      %48 = sbr.rel (0) target = $region29
    $region28: #{tpu_custom_call.1} parent=1 // pred_region
      %49 = dma.done [#allocation3], 128
    $region29: #{tpu_custom_call.1} parent=1 // pred_fallthru
      _
    // Predicated region
    $region30: #{tpu_custom_call.1} parent=1 // pred_check
      _
    $region31: #{tpu_custom_call.1} parent=1 // pred_check_branch
      %51 = sbr.rel (0) target = $region33
    $region32: #{tpu_custom_call.1} parent=1 // pred_region
      %52 = dma.done [#allocation6], 256
    $region33: #{tpu_custom_call.1} parent=1 // pred_fallthru
      _
    %v54 = vld [vmem:[#allocation2] sm:$0xff]
    %v55 = vpack.c.bf16 %v54, %v54
    %v56 = vld [vmem:[#allocation5] sm:$0xf]
    %v57 = vld [vmem:[#allocation5 + $0x4] sm:$0xf]
    %v58 = vld [vmem:[#allocation5 + $0x8] sm:$0xf]
    %v59 = vld [vmem:[#allocation5 + $0xc] sm:$0xf]
    %v60 = vld [vmem:[%s2] sm:$0x1]
    %v62 = vlaneseq
    %v63 = vshrl.u32 %v62, 7
    %v64 = vsub.s32 0, %v63
    %v65 = vrot.slane %v60, %v64
    %v71 = vunpack.c.l.b16 %v56
    %v72 = vunpack.c.l.b16 %v57
    %v73 = vunpack.c.l.b16 %v58
    %v74 = vunpack.c.l.b16 %v59
    %v75 = vpack.c.b16 %v72, %v71
    %v76 = vpack.c.b16 %v74, %v73
    %vm79 = vcmask 261120
    %v81 = vsel %vm79, %v55, 0
    %83 = vmatprep.subr.bf16.mxu0 0
    %84 = vmatpush1.bf16.msra.mxu0 %v75
    %85 = vmatprep.subr.bf16.mxu0 0
    %86 = vmatpush1.bf16.msra.mxu0 %v76
    %87 = vmatprep.subr.bf16.mxu0 0
    %88 = vmatpush1.bf16.msra.mxu0 0
    %89 = vmatprep.subr.bf16.mxu0 0
    %90 = vmatpush1.bf16.msra.mxu0 0
    %91 = vmatprep.subr.bf16.mxu0 0
    %92 = vmatpush1.bf16.msra.mxu0 0
    %93 = vmatprep.subr.bf16.mxu0 0
    %94 = vmatpush1.bf16.msra.mxu0 0
    %95 = vmatprep.subr.bf16.mxu0 0
    %96 = vmatpush1.bf16.msra.mxu0 0
    %97 = vmatprep.subr.bf16.mxu0 0
    %98 = vmatpush1.bf16.msra.mxu0 0
    %99 = vmatprep.subr.bf16.mxu0 0
    %100 = vmatpush1.bf16.msra.mxu0 0
    %101 = vmatprep.subr.bf16.mxu0 0
    %102 = vmatpush1.bf16.msra.mxu0 0
    %103 = vmatprep.subr.bf16.mxu0 0
    %104 = vmatpush1.bf16.msra.mxu0 0
    %105 = vmatprep.subr.bf16.mxu0 0
    %106 = vmatpush1.bf16.msra.mxu0 0
    %107 = vmatprep.subr.bf16.mxu0 0
    %108 = vmatpush1.bf16.msra.mxu0 0
    %109 = vmatprep.subr.bf16.mxu0 0
    %110 = vmatpush1.bf16.msra.mxu0 0
    %111 = vmatprep.subr.bf16.mxu0 0
    %112 = vmatpush1.bf16.msra.mxu0 0
    %113 = vmatprep.subr.bf16.mxu0 0
    %114 = vmatpush1.bf16.msra.mxu0 0
    %115 = vmatprep.mubr.bf16.mxu0 0
    %116 = vmatmul.mubr.bf16.gmra.mrb[0].mxu0 %v81
    %v117 = vpop.f32.mrb[0].mxu0
    %v118 = vadd.f32 %v65, %v117
    %v119 = vpop.f32.mrb[0].mxu0
    %v120 = vpop.f32.mrb[0].mxu0
    %v121 = vpop.f32.mrb[0].mxu0
    %122 = vdwg.mxu0
    %v123 = vpack.c.bf16 %v118, %v118
    %v124 = vtanh.bf16.pop %v123
    %v125 = vld [vmem:[%s3] sm:$0xf]
    %v126 = vld [vmem:[%s3 + $0x4] sm:$0xf]
    %v127 = vld [vmem:[%s3 + $0x8] sm:$0xf]
    %v128 = vld [vmem:[%s3 + $0xc] sm:$0xf]
    %v129 = vld [vmem:[%s4] sm:$0x1]
    %v131 = vlaneseq
    %v132 = vshrl.u32 %v131, 7
    %v133 = vsub.s32 0, %v132
    %v134 = vrot.slane %v129, %v133
    %v140 = vunpack.c.l.b16 %v125
    %v141 = vunpack.c.l.b16 %v126
    %v142 = vunpack.c.l.b16 %v127
    %v143 = vunpack.c.l.b16 %v128
    %v144 = vpack.c.b16 %v141, %v140
    %v145 = vpack.c.b16 %v143, %v142
    %v149 = vsel %vm79, %v124, 0
    %151 = vmatprep.subr.bf16.mxu0 0
    %152 = vmatpush1.bf16.msra.mxu0 %v144
    %153 = vmatprep.subr.bf16.mxu0 0
    %154 = vmatpush1.bf16.msra.mxu0 %v145
    %155 = vmatprep.subr.bf16.mxu0 0
    %156 = vmatpush1.bf16.msra.mxu0 0
    %157 = vmatprep.subr.bf16.mxu0 0
    %158 = vmatpush1.bf16.msra.mxu0 0
    %159 = vmatprep.subr.bf16.mxu0 0
    %160 = vmatpush1.bf16.msra.mxu0 0
    %161 = vmatprep.subr.bf16.mxu0 0
    %162 = vmatpush1.bf16.msra.mxu0 0
    %163 = vmatprep.subr.bf16.mxu0 0
    %164 = vmatpush1.bf16.msra.mxu0 0
    %165 = vmatprep.subr.bf16.mxu0 0
    %166 = vmatpush1.bf16.msra.mxu0 0
    %167 = vmatprep.subr.bf16.mxu0 0
    %168 = vmatpush1.bf16.msra.mxu0 0
    %169 = vmatprep.subr.bf16.mxu0 0
    %170 = vmatpush1.bf16.msra.mxu0 0
    %171 = vmatprep.subr.bf16.mxu0 0
    %172 = vmatpush1.bf16.msra.mxu0 0
    %173 = vmatprep.subr.bf16.mxu0 0
    %174 = vmatpush1.bf16.msra.mxu0 0
    %175 = vmatprep.subr.bf16.mxu0 0
    %176 = vmatpush1.bf16.msra.mxu0 0
    %177 = vmatprep.subr.bf16.mxu0 0
    %178 = vmatpush1.bf16.msra.mxu0 0
    %179 = vmatprep.subr.bf16.mxu0 0
    %180 = vmatpush1.bf16.msra.mxu0 0
    %181 = vmatprep.subr.bf16.mxu0 0
    %182 = vmatpush1.bf16.msra.mxu0 0
    %183 = vmatprep.mubr.bf16.mxu0 0
    %184 = vmatmul.mubr.bf16.gmra.mrb[0].mxu0 %v149
    %v185 = vpop.f32.mrb[0].mxu0
    %v186 = vadd.f32 %v134, %v185
    %v187 = vpop.f32.mrb[0].mxu0
    %v188 = vpop.f32.mrb[0].mxu0
    %v189 = vpop.f32.mrb[0].mxu0
    %190 = vdwg.mxu0
    %191 = vst [vmem:[#allocation7] sm:$0xff] %v186
    %v192 = vlaneseq
    %v193 = vand.u32 %v192, 127
    %vm194 = vcmp.lt.s32.totalorder %v193, 8
    %v195 = vsel %vm194, %v186, -1e+30
    %196 = vmax.xlane.f32.xlu0 %v195
    %v197 = vpop.xlane.xlu0 %196
    %v198 = vsub.f32 %v195, %v197
    %v199 = vmul.f32 %v198, 1.442695
    %v200 = vpow.pop %v199
    %201 = vadd.xlane.f32.xlu0 %v200
    %v202 = vpop.xlane.xlu0 %201
    %v203 = vlog2.pop %v202
    %v204 = vmul.f32 %v203, 0.6931472
    %v205 = vadd.f32 %v204, %v197
    %v206 = vld [vmem:[%s5] sm:$0xff]
    %207 = vset.pattern.permute.xlu0 0
    %208 = vperm.xlu0 %207, %v206
    %v209 = vpop.permute.xlu0 %208
    %vm210 = vcmp.eq.s32.totalorder %v193, %v209
    %v211 = vsel %vm210, %v186, 0.0
    %212 = vadd.xlane.f32.xlu0 %v211
    %v213 = vpop.xlane.xlu0 %212
    %v214 = vlaneseq
    %v215 = vshrl.u32 %v214, 7
    %s216 = smul.u32 0, 8
    %v217 = vstv %s216
    %v218 = vadd.s32 %v215, %v217
    %vm219 = vcmp.lt.s32.totalorder %v218, 8
    %vm220 = vcmp.ne.s32.totalorder %v206, 4294967196
    %vm221 = vmand %vm219, %vm220
    %v222 = vsub.f32 %v205, %v213
    %v223 = vsel %vm221, %v222, 0.0
    %v224 = vsel %vm221, 1, 0
    %v225 = vcvt.s32.f32 %v224
    %vm226 = vcmask 7168
    %v227 = vsel %vm226, %v223, 0.0
    %v228 = vrot.slane %v227, 4
    %v229 = vadd.f32 %v227, %v228
    %v230 = vrot.slane %v229, 2
    %v231 = vadd.f32 %v229, %v230
    %v232 = vrot.slane %v231, 1
    %v233 = vadd.f32 %v231, %v232
    %v234 = vsel %vm226, %v225, 0.0
    %v235 = vrot.slane %v234, 4
    %v236 = vadd.f32 %v234, %v235
    %v237 = vrot.slane %v236, 2
    %v238 = vadd.f32 %v236, %v237
    %v239 = vrot.slane %v238, 1
    %v240 = vadd.f32 %v238, %v239
    %vm241 = vcmp.eq.s32.totalorder %v215, 0
    %vm242 = vcmp.eq.s32.totalorder %v193, 0
    %vm243 = vmand %vm241, %vm242
    %vm244 = vcmp.eq.s32.totalorder %v193, 1
    %vm245 = vmand %vm241, %vm244
    %247 = vset.pattern.permute.xlu0 0
    %248 = vperm.xlu0 %247, %v240
    %v249 = vpop.permute.xlu0 %248
    %v251 = vsel %vm245, %v249, 0.0
    %253 = vset.pattern.permute.xlu0 0
    %254 = vperm.xlu0 %253, %v233
    %v255 = vpop.permute.xlu0 %254
    %v257 = vsel %vm243, %v255, %v251
    %258 = vst [vmem:[#allocation8] sm:$0xff] %v257
    // Predicated region
    $region34: #{tpu_custom_call.1} parent=1 // pred_check
      _
    $region35: #{tpu_custom_call.1} parent=1 // pred_check_branch
      %260 = sbr.rel (0) target = $region37
    $region36: #{tpu_custom_call.1} parent=1 // pred_region
      %s262 = ssub.s32 128, 128
      %263 = vsyncadd [#allocation4], %s262
      %s265 = sshll.u32 [#allocation7], 4
      %s266 = int_to_ptr.vmem [resolvable:$true] %s265
      %268 = dma.vmem_to_hbm [thread:$0]  %s266, 128, %s6, [#allocation4]
    $region37: #{tpu_custom_call.1} parent=1 // pred_fallthru
      _
    // Predicated region
    $region38: #{tpu_custom_call.1} parent=1 // pred_check
      _
    $region39: #{tpu_custom_call.1} parent=1 // pred_check_branch
      %270 = sbr.rel (0) target = $region41
    $region40: #{tpu_custom_call.1} parent=1 // pred_region
      %s272 = ssub.s32 128, 128
      %273 = vsyncadd [#allocation9], %s272
      %s275 = sshll.u32 [#allocation8], 4
      %s276 = int_to_ptr.vmem [resolvable:$true] %s275
      %278 = dma.vmem_to_hbm [thread:$0]  %s276, 128, %s7, [#allocation9]
    $region41: #{tpu_custom_call.1} parent=1 // pred_fallthru
      _
    // Predicated region
    $region42: #{tpu_custom_call.1} parent=1 // pred_check
      _
    $region43: #{tpu_custom_call.1} parent=1 // pred_check_branch
      %280 = sbr.rel (0) target = $region45
    $region44: #{tpu_custom_call.1} parent=1 // pred_region
      %281 = dma.done [#allocation4], 128
    $region45: #{tpu_custom_call.1} parent=1 // pred_fallthru
      _
    // Predicated region
    $region46: #{tpu_custom_call.1} parent=1 // pred_check
      _
    $region47: #{tpu_custom_call.1} parent=1 // pred_check_branch
      %283 = sbr.rel (0) target = $region49
    $region48: #{tpu_custom_call.1} parent=1 // pred_region
      %284 = dma.done [#allocation9], 128
    $region49: #{tpu_custom_call.1} parent=1 // pred_fallthru
      _
    %285 = vsyncpa [#allocation3], 1
    %286 = vsyncpa [#allocation6], 1
    %287 = vsyncpa [#allocation4], 1
    %288 = vsyncpa [#allocation9], 1

</llo_original>
